<compile_context>
chip_gen: v7x
topology: tpu7x:2x2x1
jax: 0.10.0
libtpu: 0.0.40
codegen_flags: <defaults>
</compile_context>

<pallas_src>
import functools

import jax
import jax.numpy as jnp
from jax.experimental import pallas as pl
from jax.experimental.pallas import tpu as pltpu


def _mlp_kernel(x_ref, w1_ref, b1_ref, w2_ref, b2_ref, w3_ref, b3_ref, o_ref):
    # Streamed input (possibly bf16); upcast once (only 2 sublanes) and keep
    # all elementwise math + accumulation in f32 on every chip generation.
    x = x_ref[...].astype(jnp.float32)                       # (2, Bt), batch on lanes

    # Layer 1 on the MXU (K=2 is free MXU slack; saves ~3 VPU ops per h1 vreg
    # vs. the broadcast-MAC formulation).
    h1 = jnp.dot(w1_ref[...], x, preferred_element_type=jnp.float32)     # (16, Bt)
    h1 = jnp.maximum(h1 + b1_ref[...], 0.0)

    # Layer 2: (16,16) @ (16,Bt) on the MXU, f32 accumulation.
    h2 = jnp.dot(w2_ref[...], h1, preferred_element_type=jnp.float32)
    h2 = jnp.maximum(h2 + b2_ref[...], 0.0)

    # Layer 3: (1,16) @ (16,Bt).
    z = jnp.dot(w3_ref[...], h2, preferred_element_type=jnp.float32) + b3_ref[...]

    # Sigmoid. Clamp so exp(-z) never overflows to inf (approx reciprocal of
    # inf is not guaranteed to give 0); exp and approx reciprocal ride the EUP,
    # keeping the VALU slot free.
    z = jnp.maximum(z, -30.0)
    o_ref[...] = pl.reciprocal(1.0 + jnp.exp(-z), approx=True).astype(o_ref.dtype)


def _pick_block_b(batch):
    """Default batch-tile (lane) width.

    - multiple of 128 (unmasked, lane-dense stores)
    - >= 2 grid steps whenever batch > 128 (both v7x TensorCores get work on
      the "parallel" axis)
    - capped at 32768 lanes: ~<6 MiB/step of VMEM (double-buffered x/out tiles
      plus the (16, Bt) f32 intermediates), comfortably inside v7x's 64 MiB
      while amortizing the ~0.35 us per-step pipeline overhead over hundreds
      of KiB of traffic.  Sweep block_b explicitly for your batch size.
    """
    half = pl.cdiv(pl.cdiv(batch, 2), 128) * 128
    return max(128, min(32768, half))


@functools.partial(jax.jit, static_argnames=("block_b", "stream_dtype", "out_dtype"))
def neural_net_forward_fm(x_fm, params, *, block_b=None,
                          stream_dtype=jnp.bfloat16, out_dtype=jnp.float32):
    """Feature-major entry point (zero wrapper HBM passes).

    x_fm: (2, B). params in nn.Linear layout: w (out, in), b (out, 1).
    Returns (1, B) in out_dtype.
    """
    B = x_fm.shape[1]
    if block_b is None:
        block_b = _pick_block_b(B)
    assert block_b % 128 == 0

    x_fm = x_fm.astype(stream_dtype)          # no-op if already stream_dtype

    # Rough per-step VMEM need (double-buffered streamed tiles + f32
    # intermediates); request it explicitly so large tiles aren't rejected by
    # the default scoped limit.  Capped at v7x's 64 MiB physical VMEM.
    per_lane = (2 * jnp.dtype(stream_dtype).itemsize * 2      # x tile, 2 buffers
                + jnp.dtype(out_dtype).itemsize * 2           # out tile, 2 buffers
                + 2 * 16 * 4)                                 # h1/h2 f32 intermediates
    vmem_limit = int(min(64 * 2**20, max(32 * 2**20, 2 * per_lane * block_b)))

    const = lambda i: (0, 0)                  # resident parameters (fetched once)
    out = pl.pallas_call(
        _mlp_kernel,
        out_shape=jax.ShapeDtypeStruct((1, B), out_dtype),
        # Ragged last block instead of a padded copy: tail lanes are don't-care
        # through the lane-independent math and masked on the final store.
        grid=(pl.cdiv(B, block_b),),
        in_specs=[
            pl.BlockSpec((2, block_b), lambda i: (0, i)),     # streamed batch tile
            pl.BlockSpec((16, 2), const),                     # w1 (resident)
            pl.BlockSpec((16, 1), const),                     # b1
            pl.BlockSpec((16, 16), const),                    # w2
            pl.BlockSpec((16, 1), const),                     # b2
            pl.BlockSpec((1, 16), const),                     # w3
            pl.BlockSpec((1, 1), const),                      # b3
        ],
        out_specs=pl.BlockSpec((1, block_b), lambda i: (0, i)),
        compiler_params=pltpu.CompilerParams(
            dimension_semantics=("parallel",),
            vmem_limit_bytes=vmem_limit),
    )(
        x_fm,
        params["w1"], params["b1"],
        params["w2"], params["b2"],
        params["w3"], params["b3"],
    )
    return out


@functools.partial(jax.jit, static_argnames=("block_b", "stream_dtype", "out_dtype"))
def neural_net_forward(x, params, *, block_b=None,
                       stream_dtype=jnp.bfloat16, out_dtype=jnp.float32):
    """PyTorch-layout entry point: x (B, 2) -> (B, 1).

    The transpose + (optional bf16) cast fuse into a single small HBM pass
    under jit (no separate pad pass).  Callers that can keep activations
    feature-major should call neural_net_forward_fm directly and skip it.
    """
    out = neural_net_forward_fm(x.T, params, block_b=block_b,
                                stream_dtype=stream_dtype, out_dtype=out_dtype)
    return out.T                                              # (B, 1)


def init_params(key):
    """Mirror nn.Linear init U(-1/sqrt(fan_in), 1/sqrt(fan_in)); weights kept
    in PyTorch (out_features, in_features) layout, biases as (out, 1)."""
    def linear_init(k, fan_in, fan_out):
        kw, kb = jax.random.split(k)
        bound = 1.0 / jnp.sqrt(fan_in)
        w = jax.random.uniform(kw, (fan_out, fan_in), jnp.float32, -bound, bound)
        b = jax.random.uniform(kb, (fan_out, 1), jnp.float32, -bound, bound)
        return w, b

    k1, k2, k3 = jax.random.split(key, 3)
    w1, b1 = linear_init(k1, 2, 16)
    w2, b2 = linear_init(k2, 16, 16)
    w3, b3 = linear_init(k3, 16, 1)
    return {"w1": w1, "b1": b1, "w2": w2, "b2": b2, "w3": w3, "b3": b3}


def reference_forward(x, p):
    h1 = jnp.maximum(x @ p["w1"].T + p["b1"].T, 0.0)
    h2 = jnp.maximum(h1 @ p["w2"].T + p["b2"].T, 0.0)
    return jax.nn.sigmoid(h2 @ p["w3"].T + p["b3"].T)


if __name__ == "__main__":
    key = jax.random.PRNGKey(0)
    k_params, k_x, k_x2 = jax.random.split(key, 3)
    params = init_params(k_params)

    # Small demo batch; block_b auto-picks 512 -> 2 grid steps (exercises the
    # pipeline and the 2-TC "parallel" split on v7x).
    B = 1024
    x = jax.random.normal(k_x, (B, 2), jnp.float32)
    ref = reference_forward(x, params)

    # Default path: bf16-streamed inputs, f32 biases + f32 accumulation.
    out_bf16 = jax.block_until_ready(neural_net_forward(x, params))
    # f32-streamed path for a tight numeric check.
    out_f32 = jax.block_until_ready(
        neural_net_forward(x, params, stream_dtype=jnp.float32))

    assert out_bf16.shape == (B, 1) and out_f32.shape == (B, 1)
    # EUP approx reciprocal -> ~1e-3 absolute on sigmoid outputs in (0, 1);
    # bf16 input-stream rounding adds a few e-3 more.  Document for users.
    assert jnp.allclose(out_f32, ref, atol=2e-3, rtol=0), \
        float(jnp.abs(out_f32 - ref).max())
    assert jnp.allclose(out_bf16, ref, atol=1e-2, rtol=0), \
        float(jnp.abs(out_bf16 - ref).max())

    # Ragged-batch path (B not a multiple of the tile / 128): the last block is
    # partial; its don't-care lanes never touch valid lanes and are masked on
    # the store.
    B2 = 300
    x2 = jax.random.normal(k_x2, (B2, 2), jnp.float32)
    out2 = jax.block_until_ready(
        neural_net_forward(x2, params, stream_dtype=jnp.float32))
    assert out2.shape == (B2, 1)
    assert jnp.allclose(out2, reference_forward(x2, params), atol=2e-3, rtol=0)

    print("KERNEL_OK")
</pallas_src>

<mosaic_0001>
module attributes {stable_mosaic.version = 11 : i64} {
  func.func @_mlp_kernel(%arg0: i32, %arg1: memref<2x512xbf16, #tpu.memory_space<vmem>>, %arg2: memref<16x2xf32, #tpu.memory_space<vmem>>, %arg3: memref<16x1xf32, #tpu.memory_space<vmem>>, %arg4: memref<16x16xf32, #tpu.memory_space<vmem>>, %arg5: memref<16x1xf32, #tpu.memory_space<vmem>>, %arg6: memref<1x16xf32, #tpu.memory_space<vmem>>, %arg7: memref<1x1xf32, #tpu.memory_space<vmem>>, %arg8: memref<1x512xf32, #tpu.memory_space<vmem>>) attributes {dimension_semantics = [#tpu.dimension_semantics<parallel>], iteration_bounds = array<i64: 2>, scalar_prefetch = 0 : i64, scratch_operands = 0 : i64, tpu.core_type = #tpu.core_type<tc>, window_params = [{transform_indices = @transform_0, window_bounds = array<i64: 2, 512>}, {pipeline_mode = #tpu.pipeline_mode<synchronous>, transform_indices = @transform_1, window_bounds = array<i64: 16, 2>}, {pipeline_mode = #tpu.pipeline_mode<synchronous>, transform_indices = @transform_2, window_bounds = array<i64: 16, 1>}, {pipeline_mode = #tpu.pipeline_mode<synchronous>, transform_indices = @transform_3, window_bounds = array<i64: 16, 16>}, {pipeline_mode = #tpu.pipeline_mode<synchronous>, transform_indices = @transform_4, window_bounds = array<i64: 16, 1>}, {pipeline_mode = #tpu.pipeline_mode<synchronous>, transform_indices = @transform_5, window_bounds = array<i64: 1, 16>}, {pipeline_mode = #tpu.pipeline_mode<synchronous>, transform_indices = @transform_6, window_bounds = array<i64: 1, 1>}, {transform_indices = @transform_7, window_bounds = array<i64: 1, 512>}]} {
    %c0 = arith.constant 0 : index
    %c0_0 = arith.constant 0 : index
    %0 = vector.load %arg1[%c0, %c0_0] : memref<2x512xbf16, #tpu.memory_space<vmem>>, vector<2x512xbf16>
    %1 = arith.extf %0 : vector<2x512xbf16> to vector<2x512xf32>
    %c0_1 = arith.constant 0 : index
    %c0_2 = arith.constant 0 : index
    %2 = vector.load %arg2[%c0_1, %c0_2] : memref<16x2xf32, #tpu.memory_space<vmem>>, vector<16x2xf32>
    %cst = arith.constant dense<0.000000e+00> : vector<16x512xf32>
    %3 = tpu.matmul %2, %1, %cst {dimension_numbers = #tpu.dot_dimension_numbers<[1], [0], [0], [1], [0, 0, 1, 1], [], []>} : vector<16x2xf32>, vector<2x512xf32>, vector<16x512xf32> -> vector<16x512xf32>
    %c0_3 = arith.constant 0 : index
    %c0_4 = arith.constant 0 : index
    %4 = vector.load %arg3[%c0_3, %c0_4] : memref<16x1xf32, #tpu.memory_space<vmem>>, vector<16x1xf32>
    %5 = vector.broadcast %4 : vector<16x1xf32> to vector<16x512xf32>
    %6 = arith.addf %3, %5 : vector<16x512xf32>
    %cst_5 = arith.constant 0.000000e+00 : f32
    %7 = vector.broadcast %cst_5 : f32 to vector<16x512xf32>
    %8 = arith.maximumf %6, %7 : vector<16x512xf32>
    %c0_6 = arith.constant 0 : index
    %c0_7 = arith.constant 0 : index
    %9 = vector.load %arg4[%c0_6, %c0_7] : memref<16x16xf32, #tpu.memory_space<vmem>>, vector<16x16xf32>
    %cst_8 = arith.constant dense<0.000000e+00> : vector<16x512xf32>
    %10 = tpu.matmul %9, %8, %cst_8 {dimension_numbers = #tpu.dot_dimension_numbers<[1], [0], [0], [1], [0, 0, 1, 1], [], []>} : vector<16x16xf32>, vector<16x512xf32>, vector<16x512xf32> -> vector<16x512xf32>
    %c0_9 = arith.constant 0 : index
    %c0_10 = arith.constant 0 : index
    %11 = vector.load %arg5[%c0_9, %c0_10] : memref<16x1xf32, #tpu.memory_space<vmem>>, vector<16x1xf32>
    %12 = vector.broadcast %11 : vector<16x1xf32> to vector<16x512xf32>
    %13 = arith.addf %10, %12 : vector<16x512xf32>
    %cst_11 = arith.constant 0.000000e+00 : f32
    %14 = vector.broadcast %cst_11 : f32 to vector<16x512xf32>
    %15 = arith.maximumf %13, %14 : vector<16x512xf32>
    %c0_12 = arith.constant 0 : index
    %c0_13 = arith.constant 0 : index
    %16 = vector.load %arg6[%c0_12, %c0_13] : memref<1x16xf32, #tpu.memory_space<vmem>>, vector<1x16xf32>
    %cst_14 = arith.constant dense<0.000000e+00> : vector<1x512xf32>
    %17 = tpu.matmul %16, %15, %cst_14 {dimension_numbers = #tpu.dot_dimension_numbers<[1], [0], [0], [1], [0, 0, 1, 1], [], []>} : vector<1x16xf32>, vector<16x512xf32>, vector<1x512xf32> -> vector<1x512xf32>
    %c0_15 = arith.constant 0 : index
    %c0_16 = arith.constant 0 : index
    %18 = vector.load %arg7[%c0_15, %c0_16] : memref<1x1xf32, #tpu.memory_space<vmem>>, vector<1x1xf32>
    %19 = vector.broadcast %18 : vector<1x1xf32> to vector<1x512xf32>
    %20 = arith.addf %17, %19 : vector<1x512xf32>
    %cst_17 = arith.constant -3.000000e+01 : f32
    %21 = vector.broadcast %cst_17 : f32 to vector<1x512xf32>
    %22 = arith.maximumf %20, %21 : vector<1x512xf32>
    %cst_18 = arith.constant 0.000000e+00 : f32
    %23 = vector.broadcast %cst_18 : f32 to vector<1x512xf32>
    %24 = arith.subf %23, %22 : vector<1x512xf32>
    %25 = math.exp %24 : vector<1x512xf32>
    %cst_19 = arith.constant 1.000000e+00 : f32
    %26 = vector.broadcast %cst_19 : f32 to vector<1x512xf32>
    %27 = arith.addf %26, %25 : vector<1x512xf32>
    %28 = tpu.reciprocal %27 {approx = true} : vector<1x512xf32> -> vector<1x512xf32>
    %c0_20 = arith.constant 0 : index
    %c0_21 = arith.constant 0 : index
    %29 = vector.load %arg8[%c0_20, %c0_21] : memref<1x512xf32, #tpu.memory_space<vmem>>, vector<1x512xf32>
    tpu.vector_store %arg8[%c0_20, %c0_21], %28 {strides = array<i32>} : memref<1x512xf32, #tpu.memory_space<vmem>>, vector<1x512xf32>,
    return
  }
  func.func @transform_0(%arg0: i32) -> (i32, i32) {
    %c0_i32 = arith.constant 0 : i32
    %c0_i32_0 = arith.constant 0 : i32
    return %c0_i32, %arg0 : i32, i32
  }
  func.func @transform_1(%arg0: i32) -> (i32, i32) {
    %c0_i32 = arith.constant 0 : i32
    %c0_i32_0 = arith.constant 0 : i32
    %c0_i32_1 = arith.constant 0 : i32
    return %c0_i32, %c0_i32_0 : i32, i32
  }
  func.func @transform_2(%arg0: i32) -> (i32, i32) {
    %c0_i32 = arith.constant 0 : i32
    %c0_i32_0 = arith.constant 0 : i32
    %c0_i32_1 = arith.constant 0 : i32
    return %c0_i32, %c0_i32_0 : i32, i32
  }
  func.func @transform_3(%arg0: i32) -> (i32, i32) {
    %c0_i32 = arith.constant 0 : i32
    %c0_i32_0 = arith.constant 0 : i32
    %c0_i32_1 = arith.constant 0 : i32
    return %c0_i32, %c0_i32_0 : i32, i32
  }
  func.func @transform_4(%arg0: i32) -> (i32, i32) {
    %c0_i32 = arith.constant 0 : i32
    %c0_i32_0 = arith.constant 0 : i32
    %c0_i32_1 = arith.constant 0 : i32
    return %c0_i32, %c0_i32_0 : i32, i32
  }
  func.func @transform_5(%arg0: i32) -> (i32, i32) {
    %c0_i32 = arith.constant 0 : i32
    %c0_i32_0 = arith.constant 0 : i32
    %c0_i32_1 = arith.constant 0 : i32
    return %c0_i32, %c0_i32_0 : i32, i32
  }
  func.func @transform_6(%arg0: i32) -> (i32, i32) {
    %c0_i32 = arith.constant 0 : i32
    %c0_i32_0 = arith.constant 0 : i32
    %c0_i32_1 = arith.constant 0 : i32
    return %c0_i32, %c0_i32_0 : i32, i32
  }
  func.func @transform_7(%arg0: i32) -> (i32, i32) {
    %c0_i32 = arith.constant 0 : i32
    %c0_i32_0 = arith.constant 0 : i32
    return %c0_i32, %arg0 : i32, i32
  }
}

</mosaic_0001>

<llo_original>
// kernel: neural_net_forward_fm.1
$region0: #{neural_net_forward_fm.1}
  #allocation0 [shape = 'u32[]', space=smem, size = 0x4, offset = 0x4, fixed_abs, tag = 'smem constant byte address 0x4 - core index']
  #allocation1 [shape = 'u32[144,128]{1,0:T(1,128)}', space=vmem, size = 0x12000, scoped, tag = 'internal scratch']
  #allocation2 [shape = 'f32[1,1]{1,0:T(1,128)S(1)}', space=vmem, size = 0x200, scoped, tag = 'scoped memory for neural_net_forward_fm.1']
  %s0 = inlined_call_operand.vmem [shape: bf16[2,1024], index: 0, kind: input, shape index: {}]
  %s1 = inlined_call_operand.vmem [shape: f32[16,2], index: 1, kind: input, shape index: {}]
  %s2 = inlined_call_operand.vmem [shape: f32[16,1], index: 2, kind: input, shape index: {}]
  %s3 = inlined_call_operand.vmem [shape: f32[16,16], index: 3, kind: input, shape index: {}]
  %s4 = inlined_call_operand.vmem [shape: f32[16,1], index: 4, kind: input, shape index: {}]
  %s5 = inlined_call_operand.vmem [shape: f32[1,16], index: 5, kind: input, shape index: {}]
  %s6 = inlined_call_operand.<no memory space> [shape: f32[1,1], index: 6, kind: input, shape index: {}]
  %s7 = inlined_call_operand.hbm [shape: f32[1,1024], index: 7, kind: output, shape index: {}]
  %s8 = sld [smem:[#allocation0]]
  $region61: #{neural_net_forward_fm.1} parent=0
    _
  %s10 = ssub.s32 1, %s8
  %s11 = scalar_select 0, %s10, %s8
  %v12 = vstv %s6
  %13 = vst [vmem:[#allocation2] sm:$0x1] %v12
  $region1: #{neural_net_forward_fm.1} parent=0
    #allocation3 [shape = 'u8[4096]{0}', space=vmem, size = 0x1000, scoped, tag = 'output window, operand 0']
    #allocation4 [shape = 's32[2]{0}', space=sflag, size = 0x8, scoped, tag = 'scoped memory for neural_net_forward_fm.1']
    %14 = vsyncpa [#allocation4], 0
    %s15 = scalar_lea.sflag [#allocation4], 1
    %16 = vsyncpa %s15, 0
    loop: start=0, step=1, limit=4
    $region2: #{neural_net_forward_fm.1} parent=1 // loop_pre_header
      _
    $region3: #{neural_net_forward_fm.1} parent=1 // loop_header
      %s18 = sphi 0, %s22
      %p19 = scmp.ge.s32.totalorder %s18, 4
      %s28 = sphi 0, %s30
      %s31 = sphi 0, %s28
      %s32 = sphi 0, %s31
      %s48 = sphi 0, %s32
      %s52 = sphi 0, %s52
      %s54 = sphi 0, %s52
      %s55 = sphi 0, %s54
      %s69 = sphi 0, %s55
      %s73 = sphi 0, %s73
      %s75 = sphi 0, %s73
      %s76 = sphi 0, %s75
      %s90 = sphi 0, %s76
      %s94 = sphi 0, %s94
      %s96 = sphi 0, %s94
      %s97 = sphi 0, %s96
      %s111 = sphi 0, %s97
      %s115 = sphi 0, %s115
      %s117 = sphi 0, %s115
      %s118 = sphi 0, %s117
      %s132 = sphi 0, %s118
      %s136 = sphi 0, %s136
      %s138 = sphi 0, %s136
      %s139 = sphi 0, %s138
      %s153 = sphi 0, %s139
      %s157 = sphi 0, %s157
      %s159 = sphi 0, %s157
      %s160 = sphi 0, %s159
      %s174 = sphi 0, %s160
      %s180 = sphi 0, %s182
      %s183 = sphi 0, %s180
      %s184 = sphi 0, %s183
      %s200 = sphi 0, %s184
    $region4: #{neural_net_forward_fm.1} parent=1 // loop_header_branch
      %21 = sbr.rel (%p19) target = $region8
    $region5: #{neural_net_forward_fm.1} parent=1 // loop_body
      %s23 = ssub.s32 %s18, 1
      %s24 = ssub.s32 %s18, 2
      %s25 = sadd.s32 %s18, 1
      %s26 = ssub.s32 %s18, %s25
      %p27 = scmp.eq.s32.totalorder %s26, 0
      %s29 = sadd.s32 %s28, 1
      %s30 = scalar_select %p27, %s28, %s29
      %p33 = pneg %p27
      %p34 = scmp.eq.s32.totalorder %s18, 1
      %p35 = por %p33, %p34
      %p36 = scmp.ne.s32.totalorder %s28, %s31
      %p37 = scmp.eq.s32.totalorder %s18, 0
      %p38 = por %p36, %p37
      %p39 = scmp.ne.s32.totalorder %s28, %s31
      %p40 = scmp.eq.s32.totalorder %s23, 1
      %p41 = por %p39, %p40
      %p42 = scmp.ne.s32.totalorder %s31, %s32
      %p43 = scmp.eq.s32.totalorder %s23, 0
      %p44 = por %p42, %p43
      %p45 = scmp.ne.s32.totalorder %s31, %s32
      %p46 = scmp.eq.s32.totalorder %s24, 1
      %p47 = por %p45, %p46
      %p49 = scmp.ne.s32.totalorder %s32, %s48
      %p50 = scmp.eq.s32.totalorder %s24, 0
      %p51 = por %p49, %p50
      %s53 = sadd.s32 %s52, 1
      %p56 = scmp.eq.s32.totalorder %s18, 1
      %p57 = scmp.ne.s32.totalorder %s52, %s54
      %p58 = scmp.eq.s32.totalorder %s18, 0
      %p59 = por %p57, %p58
      %p60 = scmp.ne.s32.totalorder %s52, %s54
      %p61 = scmp.eq.s32.totalorder %s23, 1
      %p62 = por %p60, %p61
      %p63 = scmp.ne.s32.totalorder %s54, %s55
      %p64 = scmp.eq.s32.totalorder %s23, 0
      %p65 = por %p63, %p64
      %p66 = scmp.ne.s32.totalorder %s54, %s55
      %p67 = scmp.eq.s32.totalorder %s24, 1
      %p68 = por %p66, %p67
      %p70 = scmp.ne.s32.totalorder %s55, %s69
      %p71 = scmp.eq.s32.totalorder %s24, 0
      %p72 = por %p70, %p71
      %s74 = sadd.s32 %s73, 1
      %p77 = scmp.eq.s32.totalorder %s18, 1
      %p78 = scmp.ne.s32.totalorder %s73, %s75
      %p79 = scmp.eq.s32.totalorder %s18, 0
      %p80 = por %p78, %p79
      %p81 = scmp.ne.s32.totalorder %s73, %s75
      %p82 = scmp.eq.s32.totalorder %s23, 1
      %p83 = por %p81, %p82
      %p84 = scmp.ne.s32.totalorder %s75, %s76
      %p85 = scmp.eq.s32.totalorder %s23, 0
      %p86 = por %p84, %p85
      %p87 = scmp.ne.s32.totalorder %s75, %s76
      %p88 = scmp.eq.s32.totalorder %s24, 1
      %p89 = por %p87, %p88
      %p91 = scmp.ne.s32.totalorder %s76, %s90
      %p92 = scmp.eq.s32.totalorder %s24, 0
      %p93 = por %p91, %p92
      %s95 = sadd.s32 %s94, 1
      %p98 = scmp.eq.s32.totalorder %s18, 1
      %p99 = scmp.ne.s32.totalorder %s94, %s96
      %p100 = scmp.eq.s32.totalorder %s18, 0
      %p101 = por %p99, %p100
      %p102 = scmp.ne.s32.totalorder %s94, %s96
      %p103 = scmp.eq.s32.totalorder %s23, 1
      %p104 = por %p102, %p103
      %p105 = scmp.ne.s32.totalorder %s96, %s97
      %p106 = scmp.eq.s32.totalorder %s23, 0
      %p107 = por %p105, %p106
      %p108 = scmp.ne.s32.totalorder %s96, %s97
      %p109 = scmp.eq.s32.totalorder %s24, 1
      %p110 = por %p108, %p109
      %p112 = scmp.ne.s32.totalorder %s97, %s111
      %p113 = scmp.eq.s32.totalorder %s24, 0
      %p114 = por %p112, %p113
      %s116 = sadd.s32 %s115, 1
      %p119 = scmp.eq.s32.totalorder %s18, 1
      %p120 = scmp.ne.s32.totalorder %s115, %s117
      %p121 = scmp.eq.s32.totalorder %s18, 0
      %p122 = por %p120, %p121
      %p123 = scmp.ne.s32.totalorder %s115, %s117
      %p124 = scmp.eq.s32.totalorder %s23, 1
      %p125 = por %p123, %p124
      %p126 = scmp.ne.s32.totalorder %s117, %s118
      %p127 = scmp.eq.s32.totalorder %s23, 0
      %p128 = por %p126, %p127
      %p129 = scmp.ne.s32.totalorder %s117, %s118
      %p130 = scmp.eq.s32.totalorder %s24, 1
      %p131 = por %p129, %p130
      %p133 = scmp.ne.s32.totalorder %s118, %s132
      %p134 = scmp.eq.s32.totalorder %s24, 0
      %p135 = por %p133, %p134
      %s137 = sadd.s32 %s136, 1
      %p140 = scmp.eq.s32.totalorder %s18, 1
      %p141 = scmp.ne.s32.totalorder %s136, %s138
      %p142 = scmp.eq.s32.totalorder %s18, 0
      %p143 = por %p141, %p142
      %p144 = scmp.ne.s32.totalorder %s136, %s138
      %p145 = scmp.eq.s32.totalorder %s23, 1
      %p146 = por %p144, %p145
      %p147 = scmp.ne.s32.totalorder %s138, %s139
      %p148 = scmp.eq.s32.totalorder %s23, 0
      %p149 = por %p147, %p148
      %p150 = scmp.ne.s32.totalorder %s138, %s139
      %p151 = scmp.eq.s32.totalorder %s24, 1
      %p152 = por %p150, %p151
      %p154 = scmp.ne.s32.totalorder %s139, %s153
      %p155 = scmp.eq.s32.totalorder %s24, 0
      %p156 = por %p154, %p155
      %s158 = sadd.s32 %s157, 1
      %p161 = scmp.eq.s32.totalorder %s18, 1
      %p162 = scmp.ne.s32.totalorder %s157, %s159
      %p163 = scmp.eq.s32.totalorder %s18, 0
      %p164 = por %p162, %p163
      %p165 = scmp.ne.s32.totalorder %s157, %s159
      %p166 = scmp.eq.s32.totalorder %s23, 1
      %p167 = por %p165, %p166
      %p168 = scmp.ne.s32.totalorder %s159, %s160
      %p169 = scmp.eq.s32.totalorder %s23, 0
      %p170 = por %p168, %p169
      %p171 = scmp.ne.s32.totalorder %s159, %s160
      %p172 = scmp.eq.s32.totalorder %s24, 1
      %p173 = por %p171, %p172
      %p175 = scmp.ne.s32.totalorder %s160, %s174
      %p176 = scmp.eq.s32.totalorder %s24, 0
      %p177 = por %p175, %p176
      %s178 = ssub.s32 %s18, %s25
      %p179 = scmp.eq.s32.totalorder %s178, 0
      %s181 = sadd.s32 %s180, 1
      %s182 = scalar_select %p179, %s180, %s181
      %p185 = pneg %p179
      %p186 = scmp.eq.s32.totalorder %s18, 1
      %p187 = por %p185, %p186
      %p188 = scmp.ne.s32.totalorder %s180, %s183
      %p189 = scmp.eq.s32.totalorder %s18, 0
      %p190 = por %p188, %p189
      %p191 = scmp.ne.s32.totalorder %s180, %s183
      %p192 = scmp.eq.s32.totalorder %s23, 1
      %p193 = por %p191, %p192
      %p194 = scmp.ne.s32.totalorder %s183, %s184
      %p195 = scmp.eq.s32.totalorder %s23, 0
      %p196 = por %p194, %p195
      %p197 = scmp.ne.s32.totalorder %s183, %s184
      %p198 = scmp.eq.s32.totalorder %s24, 1
      %p199 = por %p197, %p198
      %p201 = scmp.ne.s32.totalorder %s184, %s200
      %p202 = scmp.eq.s32.totalorder %s24, 0
      %p203 = por %p201, %p202
      %p204 = scmp.le.s32.totalorder 1, %s18
      %p205 = scmp.lt.s32.totalorder %s18, 3
      %p206 = pnand %p204, %p205
      %p207 = pneg %p206
      // Predicated region
      $region9: #{neural_net_forward_fm.1} parent=5 // pred_check
        _
      $region10: #{neural_net_forward_fm.1} parent=5 // pred_check_branch
        %209 = sbr.rel (%p206) target = $region12
      $region11: #{neural_net_forward_fm.1} parent=5 // pred_region
        %s210 = ssub.s32 %s18, 1
        // Predicated region
        $region13: #{neural_net_forward_fm.1} parent=11 // pred_check
          %p211 = pneg %p65
        $region14: #{neural_net_forward_fm.1} parent=11 // pred_check_branch
          %213 = sbr.rel (%p211) target = $region16
        $region15: #{neural_net_forward_fm.1} parent=11 // pred_region
          _
        $region16: #{neural_net_forward_fm.1} parent=11 // pred_fallthru
          _
        // Predicated region
        $region17: #{neural_net_forward_fm.1} parent=11 // pred_check
          %p214 = pneg %p86
        $region18: #{neural_net_forward_fm.1} parent=11 // pred_check_branch
          %216 = sbr.rel (%p214) target = $region20
        $region19: #{neural_net_forward_fm.1} parent=11 // pred_region
          _
        $region20: #{neural_net_forward_fm.1} parent=11 // pred_fallthru
          _
        // Predicated region
        $region21: #{neural_net_forward_fm.1} parent=11 // pred_check
          %p217 = pneg %p107
        $region22: #{neural_net_forward_fm.1} parent=11 // pred_check_branch
          %219 = sbr.rel (%p217) target = $region24
        $region23: #{neural_net_forward_fm.1} parent=11 // pred_region
          _
        $region24: #{neural_net_forward_fm.1} parent=11 // pred_fallthru
          _
        // Predicated region
        $region25: #{neural_net_forward_fm.1} parent=11 // pred_check
          %p220 = pneg %p128
        $region26: #{neural_net_forward_fm.1} parent=11 // pred_check_branch
          %222 = sbr.rel (%p220) target = $region28
        $region27: #{neural_net_forward_fm.1} parent=11 // pred_region
          _
        $region28: #{neural_net_forward_fm.1} parent=11 // pred_fallthru
          _
        // Predicated region
        $region29: #{neural_net_forward_fm.1} parent=11 // pred_check
          %p223 = pneg %p149
        $region30: #{neural_net_forward_fm.1} parent=11 // pred_check_branch
          %225 = sbr.rel (%p223) target = $region32
        $region31: #{neural_net_forward_fm.1} parent=11 // pred_region
          _
        $region32: #{neural_net_forward_fm.1} parent=11 // pred_fallthru
          _
        // Predicated region
        $region33: #{neural_net_forward_fm.1} parent=11 // pred_check
          %p226 = pneg %p170
        $region34: #{neural_net_forward_fm.1} parent=11 // pred_check_branch
          %228 = sbr.rel (%p226) target = $region36
        $region35: #{neural_net_forward_fm.1} parent=11 // pred_region
          _
        $region36: #{neural_net_forward_fm.1} parent=11 // pred_fallthru
          _
      $region12: #{neural_net_forward_fm.1} parent=5 // pred_fallthru
        _
      %p229 = scmp.lt.s32.totalorder %s18, 2
      // Predicated region
      $region37: #{neural_net_forward_fm.1} parent=5 // pred_check
        %p230 = pneg %p229
      $region38: #{neural_net_forward_fm.1} parent=5 // pred_check_branch
        %232 = sbr.rel (%p230) target = $region40
      $region39: #{neural_net_forward_fm.1} parent=5 // pred_region
        // Predicated region
        $region41: #{neural_net_forward_fm.1} parent=39 // pred_check
          %p233 = pneg %p38
        $region42: #{neural_net_forward_fm.1} parent=39 // pred_check_branch
          %235 = sbr.rel (%p233) target = $region44
        $region43: #{neural_net_forward_fm.1} parent=39 // pred_region
          %s236 = smul.u32 4, %s18
          %p237 = scmp.lt.s32.totalorder %s236, 7
          %s238 = scalar_select %p237, %s236, 7
          %s239 = scalar_lea.vmem %s0, %s238
          %s240 = smul.u32 4, %s18
        $region44: #{neural_net_forward_fm.1} parent=39 // pred_fallthru
          _
      $region40: #{neural_net_forward_fm.1} parent=5 // pred_fallthru
        _
      %p241 = scmp.le.s32.totalorder 1, %s18
      %p242 = scmp.lt.s32.totalorder %s18, 3
      %p243 = pnand %p241, %p242
      %p244 = pneg %p243
      // Predicated region
      $region45: #{neural_net_forward_fm.1} parent=5 // pred_check
        _
      $region46: #{neural_net_forward_fm.1} parent=5 // pred_check_branch
        %246 = sbr.rel (%p243) target = $region48
      $region47: #{neural_net_forward_fm.1} parent=5 // pred_region
        %s247 = ssub.s32 %s18, 1
        %s248 = smul.u32 4, %s23
        %p249 = scmp.lt.s32.totalorder %s248, 7
        %s250 = scalar_select %p249, %s248, 7
        %s251 = scalar_lea.vmem %s0, %s250
        %p252 = pneg %p44
        %p253 = pneg %p41
        %p254 = pneg %p65
        %p255 = pneg %p62
        %p256 = pneg %p86
        %p257 = pneg %p83
        %p258 = pneg %p107
        %p259 = pneg %p104
        %p260 = pneg %p128
        %p261 = pneg %p125
        %p262 = pneg %p149
        %p263 = pneg %p146
        %p264 = pneg %p170
        %p265 = pneg %p167
        %p266 = pneg %p196
        %p267 = pneg %p193
        %s268 = sand.u32 %s183, 1
        %s269 = scalar_lea.sflag [#allocation4], %s268
        %s270 = sand.u32 %s183, 1
        %s271 = smul.addr %s270, 4
        %s272 = scalar_lea.vmem [#allocation3], %s271
        %s273 = smul.u32 4, %s23
        %p274 = scmp.lt.s32.totalorder %s273, 7
        %s275 = scalar_select %p274, %s273, 7
        %s276 = scalar_lea.vmem %s0, %s275
        %s277 = smul.u32 4, %s23
        %s278 = smul.u32 4, %s23
        %v279 = vld [vmem:[%s276] sm:$0xf]
        %v280 = vunpack.c.l.bf16 %v279
        %v281 = vld [vmem:[%s1] sm:$0xff]
        %v282 = vld [vmem:[%s1 + $0x8] sm:$0xff]
        %v283 = vld [vmem:[%s2] sm:$0xff]
        %v284 = vld [vmem:[%s2 + $0x8] sm:$0xff]
        %286 = vset.pattern.permute.xlu0 0
        %287 = vperm.xlu0 %286, %v283
        %v288 = vpop.permute.xlu0 %287
        %291 = vset.pattern.permute.xlu0 0
        %292 = vperm.xlu0 %291, %v284
        %v293 = vpop.permute.xlu0 %292
        %v296 = vcombine.high %v280, %v280
        %v298 = vunpack.c.l.s4 1983009808
        %v299 = vunpack.c.0.s8 %v298
        %v300 = vlaneseq
        %v301 = vshrl.u32 %v300, 7
        %v302 = vsub.s32 %v299, %v301
        %v303 = vrot.slane %v280, %v302
        %v305 = vunpack.c.l.s4 1983009808
        %v306 = vunpack.c.0.s8 %v305
        %v307 = vlaneseq
        %v308 = vshrl.u32 %v307, 7
        %v309 = vsub.s32 %v306, %v308
        %v310 = vrot.slane %v296, %v309
        %v311 = vcombine.high %v303, %v303
        %v312 = vcombine.high %v310, %v310
        %vm313 = vcmask 15360
        %v315 = vsel %vm313, %v281, 0
        %v318 = vsel %vm313, %v282, 0
        %vm320 = vcmask 1041408
        %v321 = vsel %vm320, %v303, 0
        %v323 = vsel %vm320, %v311, 0
        %v325 = vsel %vm320, %v310, 0
        %v327 = vsel %vm320, %v312, 0
        %329 = vmatprep.subr.mxu0 %v323
        %330 = vmatpush1.msra.mxu0 %v321
        %331 = vmatprep.subr.mxu0 0.0
        %332 = vmatpush1.msra.mxu0 0.0
        %333 = vmatprep.subr.mxu0 0.0
        %334 = vmatpush1.msra.mxu0 0.0
        %335 = vmatprep.subr.mxu0 0.0
        %336 = vmatpush1.msra.mxu0 0.0
        %337 = vmatprep.subr.mxu0 0.0
        %338 = vmatpush1.msra.mxu0 0.0
        %339 = vmatprep.subr.mxu0 0.0
        %340 = vmatpush1.msra.mxu0 0.0
        %341 = vmatprep.subr.mxu0 0.0
        %342 = vmatpush1.msra.mxu0 0.0
        %343 = vmatprep.subr.mxu0 0.0
        %344 = vmatpush1.msra.mxu0 0.0
        %345 = vmatprep.subr.mxu0 0.0
        %346 = vmatpush1.msra.mxu0 0.0
        %347 = vmatprep.subr.mxu0 0.0
        %348 = vmatpush1.msra.mxu0 0.0
        %349 = vmatprep.subr.mxu0 0.0
        %350 = vmatpush1.msra.mxu0 0.0
        %351 = vmatprep.subr.mxu0 0.0
        %352 = vmatpush1.msra.mxu0 0.0
        %353 = vmatprep.subr.mxu0 0.0
        %354 = vmatpush1.msra.mxu0 0.0
        %355 = vmatprep.subr.mxu0 0.0
        %356 = vmatpush1.msra.mxu0 0.0
        %357 = vmatprep.subr.mxu0 0.0
        %358 = vmatpush1.msra.mxu0 0.0
        %359 = vmatprep.subr.mxu0 0.0
        %360 = vmatpush1.msra.mxu0 0.0
        %361 = vmatprep.subr.mxu0 0.0
        %362 = vmatpush1.msra.mxu0 0.0
        %363 = vmatprep.subr.mxu0 0.0
        %364 = vmatpush1.msra.mxu0 0.0
        %365 = vmatprep.subr.mxu0 0.0
        %366 = vmatpush1.msra.mxu0 0.0
        %367 = vmatprep.subr.mxu0 0.0
        %368 = vmatpush1.msra.mxu0 0.0
        %369 = vmatprep.subr.mxu0 0.0
        %370 = vmatpush1.msra.mxu0 0.0
        %371 = vmatprep.subr.mxu0 0.0
        %372 = vmatpush1.msra.mxu0 0.0
        %373 = vmatprep.subr.mxu0 0.0
        %374 = vmatpush1.msra.mxu0 0.0
        %375 = vmatprep.subr.mxu0 0.0
        %376 = vmatpush1.msra.mxu0 0.0
        %377 = vmatprep.subr.mxu0 0.0
        %378 = vmatpush1.msra.mxu0 0.0
        %379 = vmatprep.subr.mxu0 0.0
        %380 = vmatpush1.msra.mxu0 0.0
        %381 = vmatprep.subr.mxu0 0.0
        %382 = vmatpush1.msra.mxu0 0.0
        %383 = vmatprep.subr.mxu0 0.0
        %384 = vmatpush1.msra.mxu0 0.0
        %385 = vmatprep.subr.mxu0 0.0
        %386 = vmatpush1.msra.mxu0 0.0
        %387 = vmatprep.subr.mxu0 0.0
        %388 = vmatpush1.msra.mxu0 0.0
        %389 = vmatprep.subr.mxu0 0.0
        %390 = vmatpush1.msra.mxu0 0.0
        %391 = vmatprep.subr.mxu0 0.0
        %392 = vmatpush1.msra.mxu0 0.0
        %393 = vmatprep.mubr.f32.mxu0 0.0
        %394 = vmatmul.mubr.f32.gmra.mrb[0].mxu0 %v315
        %v395 = vpop.f32.mrb[0].mxu0
        %v396 = vadd.f32 %v288, %v395
        %v397 = vpop.f32.mrb[0].mxu0
        %v398 = vadd.f32 %v288, %v397
        %399 = vmatprep.mubr.f32.mxu0 0.0
        %400 = vmatmul.mubr.f32.gmra.mrb[0].mxu0 %v318
        %v401 = vpop.f32.mrb[0].mxu0
        %v402 = vadd.f32 %v293, %v401
        %v403 = vpop.f32.mrb[0].mxu0
        %v404 = vadd.f32 %v293, %v403
        %405 = vdwg.mxu0
        %406 = vmatprep.subr.mxu0 %v327
        %407 = vmatpush1.msra.mxu0 %v325
        %408 = vmatprep.subr.mxu0 0.0
        %409 = vmatpush1.msra.mxu0 0.0
        %410 = vmatprep.subr.mxu0 0.0
        %411 = vmatpush1.msra.mxu0 0.0
        %412 = vmatprep.subr.mxu0 0.0
        %413 = vmatpush1.msra.mxu0 0.0
        %414 = vmatprep.subr.mxu0 0.0
        %415 = vmatpush1.msra.mxu0 0.0
        %416 = vmatprep.subr.mxu0 0.0
        %417 = vmatpush1.msra.mxu0 0.0
        %418 = vmatprep.subr.mxu0 0.0
        %419 = vmatpush1.msra.mxu0 0.0
        %420 = vmatprep.subr.mxu0 0.0
        %421 = vmatpush1.msra.mxu0 0.0
        %422 = vmatprep.subr.mxu0 0.0
        %423 = vmatpush1.msra.mxu0 0.0
        %424 = vmatprep.subr.mxu0 0.0
        %425 = vmatpush1.msra.mxu0 0.0
        %426 = vmatprep.subr.mxu0 0.0
        %427 = vmatpush1.msra.mxu0 0.0
        %428 = vmatprep.subr.mxu0 0.0
        %429 = vmatpush1.msra.mxu0 0.0
        %430 = vmatprep.subr.mxu0 0.0
        %431 = vmatpush1.msra.mxu0 0.0
        %432 = vmatprep.subr.mxu0 0.0
        %433 = vmatpush1.msra.mxu0 0.0
        %434 = vmatprep.subr.mxu0 0.0
        %435 = vmatpush1.msra.mxu0 0.0
        %436 = vmatprep.subr.mxu0 0.0
        %437 = vmatpush1.msra.mxu0 0.0
        %438 = vmatprep.subr.mxu0 0.0
        %439 = vmatpush1.msra.mxu0 0.0
        %440 = vmatprep.subr.mxu0 0.0
        %441 = vmatpush1.msra.mxu0 0.0
        %442 = vmatprep.subr.mxu0 0.0
        %443 = vmatpush1.msra.mxu0 0.0
        %444 = vmatprep.subr.mxu0 0.0
        %445 = vmatpush1.msra.mxu0 0.0
        %446 = vmatprep.subr.mxu0 0.0
        %447 = vmatpush1.msra.mxu0 0.0
        %448 = vmatprep.subr.mxu0 0.0
        %449 = vmatpush1.msra.mxu0 0.0
        %450 = vmatprep.subr.mxu0 0.0
        %451 = vmatpush1.msra.mxu0 0.0
        %452 = vmatprep.subr.mxu0 0.0
        %453 = vmatpush1.msra.mxu0 0.0
        %454 = vmatprep.subr.mxu0 0.0
        %455 = vmatpush1.msra.mxu0 0.0
        %456 = vmatprep.subr.mxu0 0.0
        %457 = vmatpush1.msra.mxu0 0.0
        %458 = vmatprep.subr.mxu0 0.0
        %459 = vmatpush1.msra.mxu0 0.0
        %460 = vmatprep.subr.mxu0 0.0
        %461 = vmatpush1.msra.mxu0 0.0
        %462 = vmatprep.subr.mxu0 0.0
        %463 = vmatpush1.msra.mxu0 0.0
        %464 = vmatprep.subr.mxu0 0.0
        %465 = vmatpush1.msra.mxu0 0.0
        %466 = vmatprep.subr.mxu0 0.0
        %467 = vmatpush1.msra.mxu0 0.0
        %468 = vmatprep.subr.mxu0 0.0
        %469 = vmatpush1.msra.mxu0 0.0
        %470 = vmatprep.mubr.f32.mxu0 0.0
        %471 = vmatmul.mubr.f32.gmra.mrb[0].mxu0 %v315
        %v472 = vpop.f32.mrb[0].mxu0
        %v473 = vadd.f32 %v288, %v472
        %v474 = vpop.f32.mrb[0].mxu0
        %v475 = vadd.f32 %v288, %v474
        %476 = vmatprep.mubr.f32.mxu0 0.0
        %477 = vmatmul.mubr.f32.gmra.mrb[0].mxu0 %v318
        %v478 = vpop.f32.mrb[0].mxu0
        %v479 = vadd.f32 %v293, %v478
        %v480 = vpop.f32.mrb[0].mxu0
        %v481 = vadd.f32 %v293, %v480
        %482 = vdwg.mxu0
        %v483 = vmax.f32 %v396, 0.0
        %v484 = vmax.f32 %v398, 0.0
        %v485 = vmax.f32 %v473, 0.0
        %v486 = vmax.f32 %v475, 0.0
        %v487 = vmax.f32 %v402, 0.0
        %v488 = vmax.f32 %v404, 0.0
        %v489 = vmax.f32 %v479, 0.0
        %v490 = vmax.f32 %v481, 0.0
        %v491 = vld [vmem:[%s3] sm:$0xff]
        %v492 = vld [vmem:[%s3 + $0x8] sm:$0xff]
        %v493 = vld [vmem:[%s4] sm:$0xff]
        %v494 = vld [vmem:[%s4 + $0x8] sm:$0xff]
        %496 = vset.pattern.permute.xlu0 0
        %497 = vperm.xlu0 %496, %v493
        %v498 = vpop.permute.xlu0 %497
        %501 = vset.pattern.permute.xlu0 0
        %502 = vperm.xlu0 %501, %v494
        %v503 = vpop.permute.xlu0 %502
        %vm505 = vcmask 130048
        %v507 = vsel %vm505, %v491, 0
        %v510 = vsel %vm505, %v492, 0
        %512 = vmatprep.subr.mxu0 %v484
        %513 = vmatpush1.msra.mxu0 %v483
        %514 = vmatprep.subr.mxu0 %v488
        %515 = vmatpush1.msra.mxu0 %v487
        %516 = vmatprep.subr.mxu0 0.0
        %517 = vmatpush1.msra.mxu0 0.0
        %518 = vmatprep.subr.mxu0 0.0
        %519 = vmatpush1.msra.mxu0 0.0
        %520 = vmatprep.subr.mxu0 0.0
        %521 = vmatpush1.msra.mxu0 0.0
        %522 = vmatprep.subr.mxu0 0.0
        %523 = vmatpush1.msra.mxu0 0.0
        %524 = vmatprep.subr.mxu0 0.0
        %525 = vmatpush1.msra.mxu0 0.0
        %526 = vmatprep.subr.mxu0 0.0
        %527 = vmatpush1.msra.mxu0 0.0
        %528 = vmatprep.subr.mxu0 0.0
        %529 = vmatpush1.msra.mxu0 0.0
        %530 = vmatprep.subr.mxu0 0.0
        %531 = vmatpush1.msra.mxu0 0.0
        %532 = vmatprep.subr.mxu0 0.0
        %533 = vmatpush1.msra.mxu0 0.0
        %534 = vmatprep.subr.mxu0 0.0
        %535 = vmatpush1.msra.mxu0 0.0
        %536 = vmatprep.subr.mxu0 0.0
        %537 = vmatpush1.msra.mxu0 0.0
        %538 = vmatprep.subr.mxu0 0.0
        %539 = vmatpush1.msra.mxu0 0.0
        %540 = vmatprep.subr.mxu0 0.0
        %541 = vmatpush1.msra.mxu0 0.0
        %542 = vmatprep.subr.mxu0 0.0
        %543 = vmatpush1.msra.mxu0 0.0
        %544 = vmatprep.subr.mxu0 0.0
        %545 = vmatpush1.msra.mxu0 0.0
        %546 = vmatprep.subr.mxu0 0.0
        %547 = vmatpush1.msra.mxu0 0.0
        %548 = vmatprep.subr.mxu0 0.0
        %549 = vmatpush1.msra.mxu0 0.0
        %550 = vmatprep.subr.mxu0 0.0
        %551 = vmatpush1.msra.mxu0 0.0
        %552 = vmatprep.subr.mxu0 0.0
        %553 = vmatpush1.msra.mxu0 0.0
        %554 = vmatprep.subr.mxu0 0.0
        %555 = vmatpush1.msra.mxu0 0.0
        %556 = vmatprep.subr.mxu0 0.0
        %557 = vmatpush1.msra.mxu0 0.0
        %558 = vmatprep.subr.mxu0 0.0
        %559 = vmatpush1.msra.mxu0 0.0
        %560 = vmatprep.subr.mxu0 0.0
        %561 = vmatpush1.msra.mxu0 0.0
        %562 = vmatprep.subr.mxu0 0.0
        %563 = vmatpush1.msra.mxu0 0.0
        %564 = vmatprep.subr.mxu0 0.0
        %565 = vmatpush1.msra.mxu0 0.0
        %566 = vmatprep.subr.mxu0 0.0
        %567 = vmatpush1.msra.mxu0 0.0
        %568 = vmatprep.subr.mxu0 0.0
        %569 = vmatpush1.msra.mxu0 0.0
        %570 = vmatprep.subr.mxu0 0.0
        %571 = vmatpush1.msra.mxu0 0.0
        %572 = vmatprep.subr.mxu0 0.0
        %573 = vmatpush1.msra.mxu0 0.0
        %574 = vmatprep.subr.mxu0 0.0
        %575 = vmatpush1.msra.mxu0 0.0
        %576 = vmatprep.mubr.f32.mxu0 0.0
        %577 = vmatmul.mubr.f32.gmra.mrb[0].mxu0 %v507
        %v578 = vpop.f32.mrb[0].mxu0
        %v579 = vadd.f32 %v498, %v578
        %v580 = vpop.f32.mrb[0].mxu0
        %v581 = vadd.f32 %v498, %v580
        %582 = vmatprep.mubr.f32.mxu0 0.0
        %583 = vmatmul.mubr.f32.gmra.mrb[0].mxu0 %v510
        %v584 = vpop.f32.mrb[0].mxu0
        %v585 = vadd.f32 %v503, %v584
        %v586 = vpop.f32.mrb[0].mxu0
        %v587 = vadd.f32 %v503, %v586
        %588 = vdwg.mxu0
        %589 = vmatprep.subr.mxu0 %v486
        %590 = vmatpush1.msra.mxu0 %v485
        %591 = vmatprep.subr.mxu0 %v490
        %592 = vmatpush1.msra.mxu0 %v489
        %593 = vmatprep.subr.mxu0 0.0
        %594 = vmatpush1.msra.mxu0 0.0
        %595 = vmatprep.subr.mxu0 0.0
        %596 = vmatpush1.msra.mxu0 0.0
        %597 = vmatprep.subr.mxu0 0.0
        %598 = vmatpush1.msra.mxu0 0.0
        %599 = vmatprep.subr.mxu0 0.0
        %600 = vmatpush1.msra.mxu0 0.0
        %601 = vmatprep.subr.mxu0 0.0
        %602 = vmatpush1.msra.mxu0 0.0
        %603 = vmatprep.subr.mxu0 0.0
        %604 = vmatpush1.msra.mxu0 0.0
        %605 = vmatprep.subr.mxu0 0.0
        %606 = vmatpush1.msra.mxu0 0.0
        %607 = vmatprep.subr.mxu0 0.0
        %608 = vmatpush1.msra.mxu0 0.0
        %609 = vmatprep.subr.mxu0 0.0
        %610 = vmatpush1.msra.mxu0 0.0
        %611 = vmatprep.subr.mxu0 0.0
        %612 = vmatpush1.msra.mxu0 0.0
        %613 = vmatprep.subr.mxu0 0.0
        %614 = vmatpush1.msra.mxu0 0.0
        %615 = vmatprep.subr.mxu0 0.0
        %616 = vmatpush1.msra.mxu0 0.0
        %617 = vmatprep.subr.mxu0 0.0
        %618 = vmatpush1.msra.mxu0 0.0
        %619 = vmatprep.subr.mxu0 0.0
        %620 = vmatpush1.msra.mxu0 0.0
        %621 = vmatprep.subr.mxu0 0.0
        %622 = vmatpush1.msra.mxu0 0.0
        %623 = vmatprep.subr.mxu0 0.0
        %624 = vmatpush1.msra.mxu0 0.0
        %625 = vmatprep.subr.mxu0 0.0
        %626 = vmatpush1.msra.mxu0 0.0
        %627 = vmatprep.subr.mxu0 0.0
        %628 = vmatpush1.msra.mxu0 0.0
        %629 = vmatprep.subr.mxu0 0.0
        %630 = vmatpush1.msra.mxu0 0.0
        %631 = vmatprep.subr.mxu0 0.0
        %632 = vmatpush1.msra.mxu0 0.0
        %633 = vmatprep.subr.mxu0 0.0
        %634 = vmatpush1.msra.mxu0 0.0
        %635 = vmatprep.subr.mxu0 0.0
        %636 = vmatpush1.msra.mxu0 0.0
        %637 = vmatprep.subr.mxu0 0.0
        %638 = vmatpush1.msra.mxu0 0.0
        %639 = vmatprep.subr.mxu0 0.0
        %640 = vmatpush1.msra.mxu0 0.0
        %641 = vmatprep.subr.mxu0 0.0
        %642 = vmatpush1.msra.mxu0 0.0
        %643 = vmatprep.subr.mxu0 0.0
        %644 = vmatpush1.msra.mxu0 0.0
        %645 = vmatprep.subr.mxu0 0.0
        %646 = vmatpush1.msra.mxu0 0.0
        %647 = vmatprep.subr.mxu0 0.0
        %648 = vmatpush1.msra.mxu0 0.0
        %649 = vmatprep.subr.mxu0 0.0
        %650 = vmatpush1.msra.mxu0 0.0
        %651 = vmatprep.subr.mxu0 0.0
        %652 = vmatpush1.msra.mxu0 0.0
        %653 = vmatprep.mubr.f32.mxu0 0.0
        %654 = vmatmul.mubr.f32.gmra.mrb[0].mxu0 %v507
        %v655 = vpop.f32.mrb[0].mxu0
        %v656 = vadd.f32 %v498, %v655
        %v657 = vpop.f32.mrb[0].mxu0
        %v658 = vadd.f32 %v498, %v657
        %659 = vmatprep.mubr.f32.mxu0 0.0
        %660 = vmatmul.mubr.f32.gmra.mrb[0].mxu0 %v510
        %v661 = vpop.f32.mrb[0].mxu0
        %v662 = vadd.f32 %v503, %v661
        %v663 = vpop.f32.mrb[0].mxu0
        %v664 = vadd.f32 %v503, %v663
        %665 = vdwg.mxu0
        %v666 = vmax.f32 %v579, 0.0
        %v667 = vmax.f32 %v581, 0.0
        %v668 = vmax.f32 %v656, 0.0
        %v669 = vmax.f32 %v658, 0.0
        %v670 = vmax.f32 %v585, 0.0
        %v671 = vmax.f32 %v587, 0.0
        %v672 = vmax.f32 %v662, 0.0
        %v673 = vmax.f32 %v664, 0.0
        %v674 = vld [vmem:[%s5] sm:$0x1]
        %v675 = vld [vmem:[#allocation2] sm:$0x1]
        %677 = vset.pattern.permute.xlu0 0
        %678 = vperm.xlu0 %677, %v675
        %v679 = vpop.permute.xlu0 %678
        %v681 = vlaneseq
        %v682 = vshrl.u32 %v681, 7
        %v683 = vsub.s32 0, %v682
        %v684 = vrot.slane %v679, %v683
        %v686 = vsel %vm505, %v674, 0
        %688 = vmatprep.subr.mxu0 %v667
        %689 = vmatpush1.msra.mxu0 %v666
        %690 = vmatprep.subr.mxu0 %v671
        %691 = vmatpush1.msra.mxu0 %v670
        %692 = vmatprep.subr.mxu0 0.0
        %693 = vmatpush1.msra.mxu0 0.0
        %694 = vmatprep.subr.mxu0 0.0
        %695 = vmatpush1.msra.mxu0 0.0
        %696 = vmatprep.subr.mxu0 0.0
        %697 = vmatpush1.msra.mxu0 0.0
        %698 = vmatprep.subr.mxu0 0.0
        %699 = vmatpush1.msra.mxu0 0.0
        %700 = vmatprep.subr.mxu0 0.0
        %701 = vmatpush1.msra.mxu0 0.0
        %702 = vmatprep.subr.mxu0 0.0
        %703 = vmatpush1.msra.mxu0 0.0
        %704 = vmatprep.subr.mxu0 0.0
        %705 = vmatpush1.msra.mxu0 0.0
        %706 = vmatprep.subr.mxu0 0.0
        %707 = vmatpush1.msra.mxu0 0.0
        %708 = vmatprep.subr.mxu0 0.0
        %709 = vmatpush1.msra.mxu0 0.0
        %710 = vmatprep.subr.mxu0 0.0
        %711 = vmatpush1.msra.mxu0 0.0
        %712 = vmatprep.subr.mxu0 0.0
        %713 = vmatpush1.msra.mxu0 0.0
        %714 = vmatprep.subr.mxu0 0.0
        %715 = vmatpush1.msra.mxu0 0.0
        %716 = vmatprep.subr.mxu0 0.0
        %717 = vmatpush1.msra.mxu0 0.0
        %718 = vmatprep.subr.mxu0 0.0
        %719 = vmatpush1.msra.mxu0 0.0
        %720 = vmatprep.subr.mxu0 0.0
        %721 = vmatpush1.msra.mxu0 0.0
        %722 = vmatprep.subr.mxu0 0.0
        %723 = vmatpush1.msra.mxu0 0.0
        %724 = vmatprep.subr.mxu0 0.0
        %725 = vmatpush1.msra.mxu0 0.0
        %726 = vmatprep.subr.mxu0 0.0
        %727 = vmatpush1.msra.mxu0 0.0
        %728 = vmatprep.subr.mxu0 0.0
        %729 = vmatpush1.msra.mxu0 0.0
        %730 = vmatprep.subr.mxu0 0.0
        %731 = vmatpush1.msra.mxu0 0.0
        %732 = vmatprep.subr.mxu0 0.0
        %733 = vmatpush1.msra.mxu0 0.0
        %734 = vmatprep.subr.mxu0 0.0
        %735 = vmatpush1.msra.mxu0 0.0
        %736 = vmatprep.subr.mxu0 0.0
        %737 = vmatpush1.msra.mxu0 0.0
        %738 = vmatprep.subr.mxu0 0.0
        %739 = vmatpush1.msra.mxu0 0.0
        %740 = vmatprep.subr.mxu0 0.0
        %741 = vmatpush1.msra.mxu0 0.0
        %742 = vmatprep.subr.mxu0 0.0
        %743 = vmatpush1.msra.mxu0 0.0
        %744 = vmatprep.subr.mxu0 0.0
        %745 = vmatpush1.msra.mxu0 0.0
        %746 = vmatprep.subr.mxu0 0.0
        %747 = vmatpush1.msra.mxu0 0.0
        %748 = vmatprep.subr.mxu0 0.0
        %749 = vmatpush1.msra.mxu0 0.0
        %750 = vmatprep.subr.mxu0 0.0
        %751 = vmatpush1.msra.mxu0 0.0
        %752 = vmatprep.mubr.f32.mxu0 0.0
        %753 = vmatmul.mubr.f32.gmra.mrb[0].mxu0 %v686
        %v754 = vpop.f32.mrb[0].mxu0
        %v755 = vadd.f32 %v684, %v754
        %v756 = vpop.f32.mrb[0].mxu0
        %v757 = vadd.f32 %v684, %v756
        %758 = vdwg.mxu0
        %759 = vmatprep.subr.mxu0 %v669
        %760 = vmatpush1.msra.mxu0 %v668
        %761 = vmatprep.subr.mxu0 %v673
        %762 = vmatpush1.msra.mxu0 %v672
        %763 = vmatprep.subr.mxu0 0.0
        %764 = vmatpush1.msra.mxu0 0.0
        %765 = vmatprep.subr.mxu0 0.0
        %766 = vmatpush1.msra.mxu0 0.0
        %767 = vmatprep.subr.mxu0 0.0
        %768 = vmatpush1.msra.mxu0 0.0
        %769 = vmatprep.subr.mxu0 0.0
        %770 = vmatpush1.msra.mxu0 0.0
        %771 = vmatprep.subr.mxu0 0.0
        %772 = vmatpush1.msra.mxu0 0.0
        %773 = vmatprep.subr.mxu0 0.0
        %774 = vmatpush1.msra.mxu0 0.0
        %775 = vmatprep.subr.mxu0 0.0
        %776 = vmatpush1.msra.mxu0 0.0
        %777 = vmatprep.subr.mxu0 0.0
        %778 = vmatpush1.msra.mxu0 0.0
        %779 = vmatprep.subr.mxu0 0.0
        %780 = vmatpush1.msra.mxu0 0.0
        %781 = vmatprep.subr.mxu0 0.0
        %782 = vmatpush1.msra.mxu0 0.0
        %783 = vmatprep.subr.mxu0 0.0
        %784 = vmatpush1.msra.mxu0 0.0
        %785 = vmatprep.subr.mxu0 0.0
        %786 = vmatpush1.msra.mxu0 0.0
        %787 = vmatprep.subr.mxu0 0.0
        %788 = vmatpush1.msra.mxu0 0.0
        %789 = vmatprep.subr.mxu0 0.0
        %790 = vmatpush1.msra.mxu0 0.0
        %791 = vmatprep.subr.mxu0 0.0
        %792 = vmatpush1.msra.mxu0 0.0
        %793 = vmatprep.subr.mxu0 0.0
        %794 = vmatpush1.msra.mxu0 0.0
        %795 = vmatprep.subr.mxu0 0.0
        %796 = vmatpush1.msra.mxu0 0.0
        %797 = vmatprep.subr.mxu0 0.0
        %798 = vmatpush1.msra.mxu0 0.0
        %799 = vmatprep.subr.mxu0 0.0
        %800 = vmatpush1.msra.mxu0 0.0
        %801 = vmatprep.subr.mxu0 0.0
        %802 = vmatpush1.msra.mxu0 0.0
        %803 = vmatprep.subr.mxu0 0.0
        %804 = vmatpush1.msra.mxu0 0.0
        %805 = vmatprep.subr.mxu0 0.0
        %806 = vmatpush1.msra.mxu0 0.0
        %807 = vmatprep.subr.mxu0 0.0
        %808 = vmatpush1.msra.mxu0 0.0
        %809 = vmatprep.subr.mxu0 0.0
        %810 = vmatpush1.msra.mxu0 0.0
        %811 = vmatprep.subr.mxu0 0.0
        %812 = vmatpush1.msra.mxu0 0.0
        %813 = vmatprep.subr.mxu0 0.0
        %814 = vmatpush1.msra.mxu0 0.0
        %815 = vmatprep.subr.mxu0 0.0
        %816 = vmatpush1.msra.mxu0 0.0
        %817 = vmatprep.subr.mxu0 0.0
        %818 = vmatpush1.msra.mxu0 0.0
        %819 = vmatprep.subr.mxu0 0.0
        %820 = vmatpush1.msra.mxu0 0.0
        %821 = vmatprep.subr.mxu0 0.0
        %822 = vmatpush1.msra.mxu0 0.0
        %823 = vmatprep.mubr.f32.mxu0 0.0
        %824 = vmatmul.mubr.f32.gmra.mrb[0].mxu0 %v686
        %v825 = vpop.f32.mrb[0].mxu0
        %v826 = vadd.f32 %v684, %v825
        %v827 = vpop.f32.mrb[0].mxu0
        %v828 = vadd.f32 %v684, %v827
        %829 = vdwg.mxu0
        %v830 = vmax.f32 %v755, -30.0
        %v831 = vmax.f32 %v757, -30.0
        %v832 = vmax.f32 %v826, -30.0
        %v833 = vmax.f32 %v828, -30.0
        %v834 = vsub.f32 0.0, %v830
        %v835 = vsub.f32 0.0, %v831
        %v836 = vsub.f32 0.0, %v832
        %v837 = vsub.f32 0.0, %v833
        %v838 = vmul.f32 %v834, 1.442695
        %v839 = vpow.pop %v838
        %v840 = vmul.f32 %v835, 1.442695
        %v841 = vpow.pop %v840
        %v842 = vmul.f32 %v836, 1.442695
        %v843 = vpow.pop %v842
        %v844 = vmul.f32 %v837, 1.442695
        %v845 = vpow.pop %v844
        %v846 = vadd.f32 %v839, 1.0
        %v847 = vadd.f32 %v841, 1.0
        %v848 = vadd.f32 %v843, 1.0
        %v849 = vadd.f32 %v845, 1.0
        %v850 = vrcp.pop %v846
        %v851 = vrcp.pop %v847
        %v852 = vrcp.pop %v848
        %v853 = vrcp.pop %v849
        %v858 = vcombine.low %v850, %v851
        %v859 = vcombine.low %v852, %v853
        %v861 = vunpack.c.l.s4 1966171168
        %v862 = vunpack.c.0.s8 %v861
        %v863 = vlaneseq
        %v864 = vshrl.u32 %v863, 7
        %v865 = vsub.s32 %v862, %v864
        %v866 = vrot.slane %v858, %v865
        %v868 = vunpack.c.l.s4 1966171168
        %v869 = vunpack.c.0.s8 %v868
        %v870 = vlaneseq
        %v871 = vshrl.u32 %v870, 7
        %v872 = vsub.s32 %v869, %v871
        %v873 = vrot.slane %v859, %v872
        %v874 = vcombine.low %v866, %v873
        %v876 = vunpack.c.l.s4 1966171168
        %v877 = vunpack.c.0.s8 %v876
        %v878 = vlaneseq
        %v879 = vshrl.u32 %v878, 7
        %v880 = vsub.s32 %v877, %v879
        %v881 = vrot.slane %v874, %v880
        %v883 = vlaneseq
        %vm884 = vcmp.ge.s32.totalorder %v883, 0
        %vm885 = vcmp.lt.s32.totalorder %v883, 512
        %vm886 = vmand %vm884, %vm885
        %887 = vst.msk [vmem:[%s272] sm:$0xf] %vm886, %v881
        %s888 = sand.u32 %s183, 1
        %s889 = scalar_lea.sflag [#allocation4], %s888
        %s890 = sand.u32 %s183, 1
        %s891 = smul.addr %s890, 4
        %s892 = scalar_lea.vmem [#allocation3], %s891
        // Predicated region
        $region49: #{neural_net_forward_fm.1} parent=47 // pred_check
          %p893 = pneg %p193
        $region50: #{neural_net_forward_fm.1} parent=47 // pred_check_branch
          %895 = sbr.rel (%p893) target = $region52
        $region51: #{neural_net_forward_fm.1} parent=47 // pred_region
          %s896 = smul.u32 4, %s23
          %s898 = ssub.s32 64, 64
          %899 = vsyncadd %s889, %s898
          %s900 = smul.addr %s896, 16
          %s901 = scalar_lea.hbm %s7, %s900
          %s903 = sshll.u32 %s892, 4
          %s904 = int_to_ptr.vmem [resolvable:$true] %s903
          %906 = dma.vmem_to_hbm [thread:$0]  %s904, 64, %s901, %s889
        $region52: #{neural_net_forward_fm.1} parent=47 // pred_fallthru
          _
      $region48: #{neural_net_forward_fm.1} parent=5 // pred_fallthru
        _
      %p907 = scmp.le.s32.totalorder 2, %s18
      // Predicated region
      $region53: #{neural_net_forward_fm.1} parent=5 // pred_check
        %p908 = pneg %p907
      $region54: #{neural_net_forward_fm.1} parent=5 // pred_check_branch
        %910 = sbr.rel (%p908) target = $region56
      $region55: #{neural_net_forward_fm.1} parent=5 // pred_region
        %s911 = ssub.s32 %s18, 2
        // Predicated region
        $region57: #{neural_net_forward_fm.1} parent=55 // pred_check
          %p912 = pneg %p199
        $region58: #{neural_net_forward_fm.1} parent=55 // pred_check_branch
          %914 = sbr.rel (%p912) target = $region60
        $region59: #{neural_net_forward_fm.1} parent=55 // pred_region
          %s915 = sand.u32 %s184, 1
          %s916 = scalar_lea.sflag [#allocation4], %s915
          %s917 = sand.u32 %s184, 1
          %s918 = smul.addr %s917, 4
          %s919 = scalar_lea.vmem [#allocation3], %s918
          %920 = dma.done %s916, 64
        $region60: #{neural_net_forward_fm.1} parent=55 // pred_fallthru
          _
      $region56: #{neural_net_forward_fm.1} parent=5 // pred_fallthru
        _
    $region6: #{neural_net_forward_fm.1} parent=1 // loop_footer
      %s22 = sadd.s32 1, %s18
    $region7: #{neural_net_forward_fm.1} parent=1 // loop_footer_branch
      %17 = sbr.rel target = $region3
    $region8: #{neural_net_forward_fm.1} parent=1 // loop_exit
      _
    %921 = vsyncpa [#allocation4], 1
    %s922 = scalar_lea.sflag [#allocation4], 1
    %923 = vsyncpa %s922, 1

</llo_original>
